<compile_context>
chip_gen: v6e
topology: v6e:2x2x1
jax: 0.10.0
libtpu: 0.0.40
codegen_flags: <defaults>
</compile_context>

<pallas_src>
import functools

import jax
import jax.numpy as jnp
from jax import lax
from jax.experimental import pallas as pl
from jax.experimental.pallas import tpu as pltpu


# ---------------------------------------------------------------------------
# Fused Pallas kernel: dense1+ReLU -> dense2+ReLU -> dense3
# ---------------------------------------------------------------------------
def _dense_decoder_kernel(z_ref, w1_ref, b1_ref, w2_ref, b2_ref, w3_ref, b3_ref,
                          o_ref):
    # layer 1: (tm, L) @ (L, H1) + b1, ReLU   (f32 accumulate on the MXU)
    h1 = jnp.dot(z_ref[...], w1_ref[...], preferred_element_type=jnp.float32)
    h1 = jnp.maximum(h1 + b1_ref[...], 0.0)
    # layer 2: (tm, H1) @ (H1, H2) + b2, ReLU  -- h1 stays in VMEM/vregs
    h2 = jnp.dot(h1.astype(w2_ref.dtype), w2_ref[...],
                 preferred_element_type=jnp.float32)
    h2 = jnp.maximum(h2 + b2_ref[...], 0.0)
    # layer 3: (tm, H2) @ (H2, O) + b3         -- single lane-dense HBM write
    out = jnp.dot(h2.astype(w3_ref.dtype), w3_ref[...],
                  preferred_element_type=jnp.float32)
    o_ref[...] = (out + b3_ref[...]).astype(o_ref.dtype)


# ---------------------------------------------------------------------------
# Wrapper: grid over batch, weights resident across tiles
# ---------------------------------------------------------------------------
def dense_decoder_forward(z, params, *, unflatten_hw=None, tile_m=256):
    B, n_latent = z.shape
    w1, b1 = params["w1"], params["b1"]      # (L, H1), (1, H1)
    w2, b2 = params["w2"], params["b2"]      # (H1, H2), (1, H2)
    w3, b3 = params["w3"], params["b3"]      # (H2, O), (1, O)
    H1, H2, n_out = w1.shape[1], w2.shape[1], w3.shape[1]

    # Tile the batch axis; for tiny batches use a single full block
    # (block_shape == full dim satisfies the (8,128) rule).
    tm = B if B <= tile_m else tile_m
    grid = (pl.cdiv(B, tm),)

    const2d = lambda i: (0, 0)               # weights/biases: resident blocks

    out = pl.pallas_call(
        _dense_decoder_kernel,
        out_shape=jax.ShapeDtypeStruct((B, n_out), z.dtype),
        grid_spec=pltpu.PrefetchScalarGridSpec(
            num_scalar_prefetch=0,
            grid=grid,
            in_specs=[
                pl.BlockSpec((tm, n_latent), lambda i: (i, 0)),   # z tile
                pl.BlockSpec((n_latent, H1), const2d),            # w1 (resident)
                pl.BlockSpec((1, H1), const2d),                   # b1
                pl.BlockSpec((H1, H2), const2d),                  # w2
                pl.BlockSpec((1, H2), const2d),                   # b2
                pl.BlockSpec((H2, n_out), const2d),               # w3
                pl.BlockSpec((1, n_out), const2d),                # b3
            ],
            out_specs=pl.BlockSpec((tm, n_out), lambda i: (i, 0)),
        ),
        compiler_params=pltpu.CompilerParams(
            dimension_semantics=("parallel",),                    # megacore split of M tiles
        ),
    )(z, w1, b1, w2, b2, w3, b3)

    if unflatten_hw is not None:                                  # Rearrange('b (h w) -> b h w')
        h, w = unflatten_hw
        out = out.reshape(B, h, w)
    return out


# ---------------------------------------------------------------------------
# Deterministic parameter init (matches PyTorch module shapes; weights stored
# transposed as (in, out) so the kernel computes x @ W directly)
# ---------------------------------------------------------------------------
def init_params(key, n_latent, n_hidden1, n_hidden2, n_out):
    def kaiming_relu(k, fan_in, fan_out):     # kaiming_normal_, nonlinearity='relu'
        return (2.0 / fan_in) ** 0.5 * jax.random.normal(
            k, (fan_in, fan_out), jnp.float32)

    def default_linear(k, fan_in, fan_out):   # PyTorch Linear default weight init
        bound = 1.0 / fan_in ** 0.5
        return jax.random.uniform(k, (fan_in, fan_out), jnp.float32, -bound, bound)

    def bias_init(k, fan_in, fan_out):        # PyTorch Linear default bias init
        bound = 1.0 / fan_in ** 0.5
        return jax.random.uniform(k, (1, fan_out), jnp.float32, -bound, bound)

    ks = jax.random.split(key, 6)
    return {
        "w1": kaiming_relu(ks[0], n_latent, n_hidden1),
        "b1": bias_init(ks[1], n_latent, n_hidden1),
        "w2": kaiming_relu(ks[2], n_hidden1, n_hidden2),
        "b2": bias_init(ks[3], n_hidden1, n_hidden2),
        "w3": default_linear(ks[4], n_hidden2, n_out),
        "b3": bias_init(ks[5], n_hidden2, n_out),
    }


# ---------------------------------------------------------------------------
# Pure-JAX reference (used only to validate the Pallas path)
# ---------------------------------------------------------------------------
def reference_forward(z, p, unflatten_hw=None):
    hp = lax.Precision.HIGHEST
    h1 = jnp.maximum(jnp.dot(z, p["w1"], precision=hp) + p["b1"], 0.0)
    h2 = jnp.maximum(jnp.dot(h1, p["w2"], precision=hp) + p["b2"], 0.0)
    out = jnp.dot(h2, p["w3"], precision=hp) + p["b3"]
    if unflatten_hw is not None:
        h, w = unflatten_hw
        out = out.reshape(z.shape[0], h, w)
    return out


if __name__ == "__main__":
    key = jax.random.PRNGKey(0)
    k_z, k_p = jax.random.split(key)

    # Small shapes implied by the module: latent -> hidden1 -> hidden2 -> h*w
    B, n_latent, n_hidden1, n_hidden2, H, W = 2, 8, 32, 64, 16, 16
    n_out = H * W                                    # unflatten_output=True, w*h == n_out

    z = jax.random.normal(k_z, (B, n_latent), jnp.float32)
    params = init_params(k_p, n_latent, n_hidden1, n_hidden2, n_out)

    fwd = jax.jit(functools.partial(dense_decoder_forward, params=params,
                                    unflatten_hw=(H, W)))
    x_hat = fwd(z)
    jax.block_until_ready(x_hat)

    assert x_hat.shape == (B, H, W), x_hat.shape
    ref = reference_forward(z, params, unflatten_hw=(H, W))
    assert jnp.allclose(x_hat, ref, atol=1e-4, rtol=1e-4), \
        float(jnp.max(jnp.abs(x_hat - ref)))
    print("KERNEL_OK")
</pallas_src>

<mosaic_0001>
module attributes {stable_mosaic.version = 11 : i64} {
  func.func @_dense_decoder_kernel(%arg0: i32, %arg1: memref<2x8xf32, #tpu.memory_space<vmem>>, %arg2: memref<8x32xf32, #tpu.memory_space<vmem>>, %arg3: memref<1x32xf32, #tpu.memory_space<vmem>>, %arg4: memref<32x64xf32, #tpu.memory_space<vmem>>, %arg5: memref<1x64xf32, #tpu.memory_space<vmem>>, %arg6: memref<64x256xf32, #tpu.memory_space<vmem>>, %arg7: memref<1x256xf32, #tpu.memory_space<vmem>>, %arg8: memref<2x256xf32, #tpu.memory_space<vmem>>) attributes {dimension_semantics = [#tpu.dimension_semantics<parallel>], iteration_bounds = array<i64: 1>, scalar_prefetch = 0 : i64, scratch_operands = 0 : i64, tpu.core_type = #tpu.core_type<tc>, window_params = [{transform_indices = @transform_0, window_bounds = array<i64: 2, 8>}, {pipeline_mode = #tpu.pipeline_mode<synchronous>, transform_indices = @transform_1, window_bounds = array<i64: 8, 32>}, {pipeline_mode = #tpu.pipeline_mode<synchronous>, transform_indices = @transform_2, window_bounds = array<i64: 1, 32>}, {pipeline_mode = #tpu.pipeline_mode<synchronous>, transform_indices = @transform_3, window_bounds = array<i64: 32, 64>}, {pipeline_mode = #tpu.pipeline_mode<synchronous>, transform_indices = @transform_4, window_bounds = array<i64: 1, 64>}, {pipeline_mode = #tpu.pipeline_mode<synchronous>, transform_indices = @transform_5, window_bounds = array<i64: 64, 256>}, {pipeline_mode = #tpu.pipeline_mode<synchronous>, transform_indices = @transform_6, window_bounds = array<i64: 1, 256>}, {transform_indices = @transform_7, window_bounds = array<i64: 2, 256>}]} {
    %c0 = arith.constant 0 : index
    %c0_0 = arith.constant 0 : index
    %0 = vector.load %arg1[%c0, %c0_0] : memref<2x8xf32, #tpu.memory_space<vmem>>, vector<2x8xf32>
    %c0_1 = arith.constant 0 : index
    %c0_2 = arith.constant 0 : index
    %1 = vector.load %arg2[%c0_1, %c0_2] : memref<8x32xf32, #tpu.memory_space<vmem>>, vector<8x32xf32>
    %cst = arith.constant dense<0.000000e+00> : vector<2x32xf32>
    %2 = tpu.matmul %0, %1, %cst {dimension_numbers = #tpu.dot_dimension_numbers<[1], [0], [0], [1], [0, 0, 1, 1], [], []>} : vector<2x8xf32>, vector<8x32xf32>, vector<2x32xf32> -> vector<2x32xf32>
    %c0_3 = arith.constant 0 : index
    %c0_4 = arith.constant 0 : index
    %3 = vector.load %arg3[%c0_3, %c0_4] : memref<1x32xf32, #tpu.memory_space<vmem>>, vector<1x32xf32>
    %4 = vector.broadcast %3 : vector<1x32xf32> to vector<2x32xf32>
    %5 = arith.addf %2, %4 : vector<2x32xf32>
    %cst_5 = arith.constant 0.000000e+00 : f32
    %6 = vector.broadcast %cst_5 : f32 to vector<2x32xf32>
    %7 = arith.maximumf %5, %6 : vector<2x32xf32>
    %c0_6 = arith.constant 0 : index
    %c0_7 = arith.constant 0 : index
    %8 = vector.load %arg4[%c0_6, %c0_7] : memref<32x64xf32, #tpu.memory_space<vmem>>, vector<32x64xf32>
    %cst_8 = arith.constant dense<0.000000e+00> : vector<2x64xf32>
    %9 = tpu.matmul %7, %8, %cst_8 {dimension_numbers = #tpu.dot_dimension_numbers<[1], [0], [0], [1], [0, 0, 1, 1], [], []>} : vector<2x32xf32>, vector<32x64xf32>, vector<2x64xf32> -> vector<2x64xf32>
    %c0_9 = arith.constant 0 : index
    %c0_10 = arith.constant 0 : index
    %10 = vector.load %arg5[%c0_9, %c0_10] : memref<1x64xf32, #tpu.memory_space<vmem>>, vector<1x64xf32>
    %11 = vector.broadcast %10 : vector<1x64xf32> to vector<2x64xf32>
    %12 = arith.addf %9, %11 : vector<2x64xf32>
    %cst_11 = arith.constant 0.000000e+00 : f32
    %13 = vector.broadcast %cst_11 : f32 to vector<2x64xf32>
    %14 = arith.maximumf %12, %13 : vector<2x64xf32>
    %c0_12 = arith.constant 0 : index
    %c0_13 = arith.constant 0 : index
    %15 = vector.load %arg6[%c0_12, %c0_13] : memref<64x256xf32, #tpu.memory_space<vmem>>, vector<64x256xf32>
    %cst_14 = arith.constant dense<0.000000e+00> : vector<2x256xf32>
    %16 = tpu.matmul %14, %15, %cst_14 {dimension_numbers = #tpu.dot_dimension_numbers<[1], [0], [0], [1], [0, 0, 1, 1], [], []>} : vector<2x64xf32>, vector<64x256xf32>, vector<2x256xf32> -> vector<2x256xf32>
    %c0_15 = arith.constant 0 : index
    %c0_16 = arith.constant 0 : index
    %17 = vector.load %arg7[%c0_15, %c0_16] : memref<1x256xf32, #tpu.memory_space<vmem>>, vector<1x256xf32>
    %18 = vector.broadcast %17 : vector<1x256xf32> to vector<2x256xf32>
    %19 = arith.addf %16, %18 : vector<2x256xf32>
    %c0_17 = arith.constant 0 : index
    %c0_18 = arith.constant 0 : index
    %20 = vector.load %arg8[%c0_17, %c0_18] : memref<2x256xf32, #tpu.memory_space<vmem>>, vector<2x256xf32>
    tpu.vector_store %arg8[%c0_17, %c0_18], %19 {strides = array<i32>} : memref<2x256xf32, #tpu.memory_space<vmem>>, vector<2x256xf32>,
    return
  }
  func.func @transform_0(%arg0: i32) -> (i32, i32) {
    %c0_i32 = arith.constant 0 : i32
    %c0_i32_0 = arith.constant 0 : i32
    return %arg0, %c0_i32 : i32, i32
  }
  func.func @transform_1(%arg0: i32) -> (i32, i32) {
    %c0_i32 = arith.constant 0 : i32
    %c0_i32_0 = arith.constant 0 : i32
    %c0_i32_1 = arith.constant 0 : i32
    return %c0_i32, %c0_i32_0 : i32, i32
  }
  func.func @transform_2(%arg0: i32) -> (i32, i32) {
    %c0_i32 = arith.constant 0 : i32
    %c0_i32_0 = arith.constant 0 : i32
    %c0_i32_1 = arith.constant 0 : i32
    return %c0_i32, %c0_i32_0 : i32, i32
  }
  func.func @transform_3(%arg0: i32) -> (i32, i32) {
    %c0_i32 = arith.constant 0 : i32
    %c0_i32_0 = arith.constant 0 : i32
    %c0_i32_1 = arith.constant 0 : i32
    return %c0_i32, %c0_i32_0 : i32, i32
  }
  func.func @transform_4(%arg0: i32) -> (i32, i32) {
    %c0_i32 = arith.constant 0 : i32
    %c0_i32_0 = arith.constant 0 : i32
    %c0_i32_1 = arith.constant 0 : i32
    return %c0_i32, %c0_i32_0 : i32, i32
  }
  func.func @transform_5(%arg0: i32) -> (i32, i32) {
    %c0_i32 = arith.constant 0 : i32
    %c0_i32_0 = arith.constant 0 : i32
    %c0_i32_1 = arith.constant 0 : i32
    return %c0_i32, %c0_i32_0 : i32, i32
  }
  func.func @transform_6(%arg0: i32) -> (i32, i32) {
    %c0_i32 = arith.constant 0 : i32
    %c0_i32_0 = arith.constant 0 : i32
    %c0_i32_1 = arith.constant 0 : i32
    return %c0_i32, %c0_i32_0 : i32, i32
  }
  func.func @transform_7(%arg0: i32) -> (i32, i32) {
    %c0_i32 = arith.constant 0 : i32
    %c0_i32_0 = arith.constant 0 : i32
    return %arg0, %c0_i32 : i32, i32
  }
}

</mosaic_0001>

<llo_original>
// kernel: dense_decoder_forward.1
$region0: #{dense_decoder_forward.1}
  #allocation0 [shape = 'u32[]', space=smem, size = 0x4, offset = 0x4, fixed_abs, tag = 'smem constant byte address 0x4 - core index']
  #allocation1 [shape = 'u32[144,128]{1,0:T(1,128)}', space=vmem, size = 0x12000, scoped, tag = 'internal scratch']
  %s0 = inlined_call_operand.hbm [shape: f32[2,8], index: 0, kind: input, shape index: {}]
  %s1 = inlined_call_operand.hbm [shape: f32[8,32], index: 1, kind: input, shape index: {}]
  %s2 = inlined_call_operand.hbm [shape: f32[1,32], index: 2, kind: input, shape index: {}]
  %s3 = inlined_call_operand.hbm [shape: f32[32,64], index: 3, kind: input, shape index: {}]
  %s4 = inlined_call_operand.vmem [shape: f32[1,64], index: 4, kind: input, shape index: {}]
  %s5 = inlined_call_operand.hbm [shape: f32[64,256], index: 5, kind: input, shape index: {}]
  %s6 = inlined_call_operand.vmem [shape: f32[1,256], index: 6, kind: input, shape index: {}]
  %s7 = inlined_call_operand.vmem [shape: f32[2,256], index: 7, kind: output, shape index: {}]
  %s8 = sld [smem:[#allocation0]]
  $region58: #{dense_decoder_forward.1} parent=0
    _
  %s10 = ssub.s32 1, %s8
  %s11 = scalar_select 0, %s10, %s8
  $region1: #{dense_decoder_forward.1} parent=0
    #allocation2 [shape = 'u8[1024]{0}', space=vmem, size = 0x400, scoped, tag = 'input window, operand 0, single buffered']
    #allocation3 [shape = 's32[1]{0}', space=sflag, size = 0x4, scoped, tag = 'scoped memory for dense_decoder_forward.1']
    #allocation4 [shape = 'u8[4096]{0}', space=vmem, size = 0x1000, scoped, tag = 'input window, operand 1, single buffered']
    #allocation5 [shape = 's32[1]{0}', space=sflag, size = 0x4, scoped, tag = 'scoped memory for dense_decoder_forward.1']
    #allocation6 [shape = 'u8[512]{0}', space=vmem, size = 0x400, scoped, tag = 'input window, operand 2, single buffered']
    #allocation7 [shape = 'u8[16384]{0}', space=vmem, size = 0x4000, scoped, tag = 'input window, operand 3, single buffered']
    #allocation8 [shape = 's32[1]{0}', space=sflag, size = 0x4, scoped, tag = 'scoped memory for dense_decoder_forward.1']
    #allocation9 [shape = 'u8[65536]{0}', space=vmem, size = 0x10000, scoped, tag = 'input window, operand 5, single buffered']
    %12 = vsyncpa [#allocation3], 0
    %13 = vsyncpa [#allocation5], 0
    %14 = vsyncpa [#allocation8], 0
    // Predicated region
    $region2: #{dense_decoder_forward.1} parent=1 // pred_check
      _
    $region3: #{dense_decoder_forward.1} parent=1 // pred_check_branch
      %16 = sbr.rel (0) target = $region5
    $region4: #{dense_decoder_forward.1} parent=1 // pred_region
      %s18 = ssub.s32 32, 32
      %19 = vsyncadd [#allocation3], %s18
      %s21 = sshll.u32 [#allocation2], 4
      %s22 = int_to_ptr.vmem [resolvable:$true] %s21
      %24 = dma.hbm_to_vmem [thread:$0]  %s0, 32, %s22, [#allocation3]
    $region5: #{dense_decoder_forward.1} parent=1 // pred_fallthru
      _
    // Predicated region
    $region6: #{dense_decoder_forward.1} parent=1 // pred_check
      _
    $region7: #{dense_decoder_forward.1} parent=1 // pred_check_branch
      %26 = sbr.rel (0) target = $region9
    $region8: #{dense_decoder_forward.1} parent=1 // pred_region
      %s28 = ssub.s32 128, 128
      %29 = vsyncadd [#allocation5], %s28
      %s31 = sshll.u32 [#allocation4], 4
      %s32 = int_to_ptr.vmem [resolvable:$true] %s31
      %34 = dma.hbm_to_vmem [thread:$0]  %s1, 128, %s32, [#allocation5]
    $region9: #{dense_decoder_forward.1} parent=1 // pred_fallthru
      _
    // Predicated region
    $region10: #{dense_decoder_forward.1} parent=1 // pred_check
      _
    $region11: #{dense_decoder_forward.1} parent=1 // pred_check_branch
      %36 = sbr.rel (0) target = $region13
    $region12: #{dense_decoder_forward.1} parent=1 // pred_region
      %s38 = ssub.s32 16, 16
      %39 = vsyncadd [#allocation5], %s38
      %s41 = sshll.u32 [#allocation6], 4
      %s42 = int_to_ptr.vmem [resolvable:$true] %s41
      %44 = dma.hbm_to_vmem [thread:$0]  %s2, 16, %s42, [#allocation5]
    $region13: #{dense_decoder_forward.1} parent=1 // pred_fallthru
      _
    // Predicated region
    $region14: #{dense_decoder_forward.1} parent=1 // pred_check
      _
    $region15: #{dense_decoder_forward.1} parent=1 // pred_check_branch
      %46 = sbr.rel (0) target = $region17
    $region16: #{dense_decoder_forward.1} parent=1 // pred_region
      %s48 = ssub.s32 512, 512
      %49 = vsyncadd [#allocation8], %s48
      %s50 = sshll.u32 [#allocation7], 4
      %s51 = int_to_ptr.vmem [resolvable:$true] %s50
      %56 = dma.hbm_to_vmem [thread:$0]  %s3, 512, %s51, [#allocation8], 128, 128, 8
    $region17: #{dense_decoder_forward.1} parent=1 // pred_fallthru
      _
    // Predicated region
    $region18: #{dense_decoder_forward.1} parent=1 // pred_check
      _
    $region19: #{dense_decoder_forward.1} parent=1 // pred_check_branch
      %58 = sbr.rel (0) target = $region21
    $region20: #{dense_decoder_forward.1} parent=1 // pred_region
      _
    $region21: #{dense_decoder_forward.1} parent=1 // pred_fallthru
      _
    // Predicated region
    $region22: #{dense_decoder_forward.1} parent=1 // pred_check
      _
    $region23: #{dense_decoder_forward.1} parent=1 // pred_check_branch
      %60 = sbr.rel (0) target = $region25
    $region24: #{dense_decoder_forward.1} parent=1 // pred_region
      %s62 = ssub.s32 2048, 2048
      %63 = vsyncadd [#allocation8], %s62
      %s64 = sshll.u32 [#allocation9], 4
      %s65 = int_to_ptr.vmem [resolvable:$true] %s64
      %70 = dma.hbm_to_vmem [thread:$0]  %s5, 2048, %s65, [#allocation8], 256, 256, 16
    $region25: #{dense_decoder_forward.1} parent=1 // pred_fallthru
      _
    // Predicated region
    $region26: #{dense_decoder_forward.1} parent=1 // pred_check
      _
    $region27: #{dense_decoder_forward.1} parent=1 // pred_check_branch
      %72 = sbr.rel (0) target = $region29
    $region28: #{dense_decoder_forward.1} parent=1 // pred_region
      _
    $region29: #{dense_decoder_forward.1} parent=1 // pred_fallthru
      _
    // Predicated region
    $region30: #{dense_decoder_forward.1} parent=1 // pred_check
      _
    $region31: #{dense_decoder_forward.1} parent=1 // pred_check_branch
      %74 = sbr.rel (0) target = $region33
    $region32: #{dense_decoder_forward.1} parent=1 // pred_region
      %75 = dma.done [#allocation3], 32
    $region33: #{dense_decoder_forward.1} parent=1 // pred_fallthru
      _
    // Predicated region
    $region34: #{dense_decoder_forward.1} parent=1 // pred_check
      _
    $region35: #{dense_decoder_forward.1} parent=1 // pred_check_branch
      %77 = sbr.rel (0) target = $region37
    $region36: #{dense_decoder_forward.1} parent=1 // pred_region
      %78 = dma.done [#allocation5], 128
    $region37: #{dense_decoder_forward.1} parent=1 // pred_fallthru
      _
    // Predicated region
    $region38: #{dense_decoder_forward.1} parent=1 // pred_check
      _
    $region39: #{dense_decoder_forward.1} parent=1 // pred_check_branch
      %80 = sbr.rel (0) target = $region41
    $region40: #{dense_decoder_forward.1} parent=1 // pred_region
      %81 = dma.done [#allocation5], 16
    $region41: #{dense_decoder_forward.1} parent=1 // pred_fallthru
      _
    // Predicated region
    $region42: #{dense_decoder_forward.1} parent=1 // pred_check
      _
    $region43: #{dense_decoder_forward.1} parent=1 // pred_check_branch
      %83 = sbr.rel (0) target = $region45
    $region44: #{dense_decoder_forward.1} parent=1 // pred_region
      %84 = dma.done [#allocation8], 512
    $region45: #{dense_decoder_forward.1} parent=1 // pred_fallthru
      _
    // Predicated region
    $region46: #{dense_decoder_forward.1} parent=1 // pred_check
      _
    $region47: #{dense_decoder_forward.1} parent=1 // pred_check_branch
      %86 = sbr.rel (0) target = $region49
    $region48: #{dense_decoder_forward.1} parent=1 // pred_region
      %87 = dma.done [#allocation8], 2048
    $region49: #{dense_decoder_forward.1} parent=1 // pred_fallthru
      _
    %v88 = vld [vmem:[#allocation2] sm:$0x3]
    %v89 = vld [vmem:[#allocation4] sm:$0xff]
    %v90 = vld [vmem:[#allocation6] sm:$0x1]
    %v92 = vlaneseq
    %v93 = vshrl.u32 %v92, 7
    %v94 = vsub.s32 0, %v93
    %v95 = vrot.slane %v90, %v94
    %vm97 = vcmask 64512
    %v99 = vsel %vm97, %v88, 0
    %101 = vmatprep.subr.mxu0 0.0
    %102 = vmatpush1.msra.mxu0 0.0
    %103 = vmatprep.subr.mxu0 0.0
    %104 = vmatpush1.msra.mxu0 0.0
    %105 = vmatprep.subr.mxu0 0.0
    %106 = vmatpush1.msra.mxu0 0.0
    %107 = vmatprep.subr.mxu0 0.0
    %108 = vmatpush1.msra.mxu0 0.0
    %109 = vmatprep.subr.mxu0 0.0
    %110 = vmatpush1.msra.mxu0 0.0
    %111 = vmatprep.subr.mxu0 0.0
    %112 = vmatpush1.msra.mxu0 0.0
    %113 = vmatprep.subr.mxu0 0.0
    %114 = vmatpush1.msra.mxu0 0.0
    %115 = vmatprep.subr.mxu0 0.0
    %116 = vmatpush1.msra.mxu0 0.0
    %117 = vmatprep.subr.mxu0 0.0
    %118 = vmatpush1.msra.mxu0 0.0
    %119 = vmatprep.subr.mxu0 0.0
    %120 = vmatpush1.msra.mxu0 0.0
    %121 = vmatprep.subr.mxu0 0.0
    %122 = vmatpush1.msra.mxu0 0.0
    %123 = vmatprep.subr.mxu0 0.0
    %124 = vmatpush1.msra.mxu0 0.0
    %125 = vmatprep.subr.mxu0 0.0
    %126 = vmatpush1.msra.mxu0 0.0
    %127 = vmatprep.subr.mxu0 0.0
    %128 = vmatpush1.msra.mxu0 0.0
    %129 = vmatprep.subr.mxu0 0.0
    %130 = vmatpush1.msra.mxu0 0.0
    %131 = vmatprep.subr.mxu0 0.0
    %132 = vmatpush1.msra.mxu0 %v89
    %133 = vmatprep.subr.mxu0 0.0
    %134 = vmatpush2.msra.mxu0 0.0
    %135 = vmatprep.subr.mxu0 0.0
    %136 = vmatpush2.msra.mxu0 0.0
    %137 = vmatprep.subr.mxu0 0.0
    %138 = vmatpush2.msra.mxu0 0.0
    %139 = vmatprep.subr.mxu0 0.0
    %140 = vmatpush2.msra.mxu0 0.0
    %141 = vmatprep.subr.mxu0 0.0
    %142 = vmatpush2.msra.mxu0 0.0
    %143 = vmatprep.subr.mxu0 0.0
    %144 = vmatpush2.msra.mxu0 0.0
    %145 = vmatprep.subr.mxu0 0.0
    %146 = vmatpush2.msra.mxu0 0.0
    %147 = vmatprep.subr.mxu0 0.0
    %148 = vmatpush2.msra.mxu0 0.0
    %149 = vmatprep.subr.mxu0 0.0
    %150 = vmatpush2.msra.mxu0 0.0
    %151 = vmatprep.subr.mxu0 0.0
    %152 = vmatpush2.msra.mxu0 0.0
    %153 = vmatprep.subr.mxu0 0.0
    %154 = vmatpush2.msra.mxu0 0.0
    %155 = vmatprep.subr.mxu0 0.0
    %156 = vmatpush2.msra.mxu0 0.0
    %157 = vmatprep.subr.mxu0 0.0
    %158 = vmatpush2.msra.mxu0 0.0
    %159 = vmatprep.subr.mxu0 0.0
    %160 = vmatpush2.msra.mxu0 0.0
    %161 = vmatprep.subr.mxu0 0.0
    %162 = vmatpush2.msra.mxu0 0.0
    %163 = vmatprep.subr.mxu0 0.0
    %164 = vmatpush2.msra.mxu0 0.0
    %165 = vmatprep.mubr.f32.mxu0 0.0
    %166 = vmatmul.mubr.f32.gmra.mxu0 %v99
    %v167 = vpop.f32.mrf.mxu0
    %v168 = vadd.f32 %v95, %v167
    %v169 = vpop.f32.mrf.mxu0
    %170 = vdwg.mxu0
    %v171 = vmax.f32 %v168, 0.0
    %v172 = vld [vmem:[#allocation7] sm:$0xff]
    %v173 = vld [vmem:[#allocation7 + $0x8] sm:$0xff]
    %v174 = vld [vmem:[#allocation7 + $0x10] sm:$0xff]
    %v175 = vld [vmem:[#allocation7 + $0x18] sm:$0xff]
    %v176 = vld [vmem:[%s4] sm:$0x1]
    %v178 = vlaneseq
    %v179 = vshrl.u32 %v178, 7
    %v180 = vsub.s32 0, %v179
    %v181 = vrot.slane %v176, %v180
    %vm183 = vcmask 261120
    %v185 = vsel %vm183, %v171, 0
    %187 = vmatprep.subr.mxu0 0.0
    %188 = vmatpush1.msra.mxu0 0.0
    %189 = vmatprep.subr.mxu0 0.0
    %190 = vmatpush1.msra.mxu0 0.0
    %191 = vmatprep.subr.mxu0 0.0
    %192 = vmatpush1.msra.mxu0 0.0
    %193 = vmatprep.subr.mxu0 0.0
    %194 = vmatpush1.msra.mxu0 0.0
    %195 = vmatprep.subr.mxu0 0.0
    %196 = vmatpush1.msra.mxu0 0.0
    %197 = vmatprep.subr.mxu0 0.0
    %198 = vmatpush1.msra.mxu0 0.0
    %199 = vmatprep.subr.mxu0 0.0
    %200 = vmatpush1.msra.mxu0 0.0
    %201 = vmatprep.subr.mxu0 0.0
    %202 = vmatpush1.msra.mxu0 0.0
    %203 = vmatprep.subr.mxu0 0.0
    %204 = vmatpush1.msra.mxu0 0.0
    %205 = vmatprep.subr.mxu0 0.0
    %206 = vmatpush1.msra.mxu0 0.0
    %207 = vmatprep.subr.mxu0 0.0
    %208 = vmatpush1.msra.mxu0 0.0
    %209 = vmatprep.subr.mxu0 0.0
    %210 = vmatpush1.msra.mxu0 0.0
    %211 = vmatprep.subr.mxu0 0.0
    %212 = vmatpush1.msra.mxu0 %v175
    %213 = vmatprep.subr.mxu0 0.0
    %214 = vmatpush1.msra.mxu0 %v174
    %215 = vmatprep.subr.mxu0 0.0
    %216 = vmatpush1.msra.mxu0 %v173
    %217 = vmatprep.subr.mxu0 0.0
    %218 = vmatpush1.msra.mxu0 %v172
    %219 = vmatprep.subr.mxu0 0.0
    %220 = vmatpush2.msra.mxu0 0.0
    %221 = vmatprep.subr.mxu0 0.0
    %222 = vmatpush2.msra.mxu0 0.0
    %223 = vmatprep.subr.mxu0 0.0
    %224 = vmatpush2.msra.mxu0 0.0
    %225 = vmatprep.subr.mxu0 0.0
    %226 = vmatpush2.msra.mxu0 0.0
    %227 = vmatprep.subr.mxu0 0.0
    %228 = vmatpush2.msra.mxu0 0.0
    %229 = vmatprep.subr.mxu0 0.0
    %230 = vmatpush2.msra.mxu0 0.0
    %231 = vmatprep.subr.mxu0 0.0
    %232 = vmatpush2.msra.mxu0 0.0
    %233 = vmatprep.subr.mxu0 0.0
    %234 = vmatpush2.msra.mxu0 0.0
    %235 = vmatprep.subr.mxu0 0.0
    %236 = vmatpush2.msra.mxu0 0.0
    %237 = vmatprep.subr.mxu0 0.0
    %238 = vmatpush2.msra.mxu0 0.0
    %239 = vmatprep.subr.mxu0 0.0
    %240 = vmatpush2.msra.mxu0 0.0
    %241 = vmatprep.subr.mxu0 0.0
    %242 = vmatpush2.msra.mxu0 0.0
    %243 = vmatprep.subr.mxu0 0.0
    %244 = vmatpush2.msra.mxu0 0.0
    %245 = vmatprep.subr.mxu0 0.0
    %246 = vmatpush2.msra.mxu0 0.0
    %247 = vmatprep.subr.mxu0 0.0
    %248 = vmatpush2.msra.mxu0 0.0
    %249 = vmatprep.subr.mxu0 0.0
    %250 = vmatpush2.msra.mxu0 0.0
    %251 = vmatprep.mubr.f32.mxu0 0.0
    %252 = vmatmul.mubr.f32.gmra.mxu0 %v185
    %v253 = vpop.f32.mrf.mxu0
    %v254 = vadd.f32 %v181, %v253
    %v255 = vpop.f32.mrf.mxu0
    %256 = vdwg.mxu0
    %v257 = vmax.f32 %v254, 0.0
    %v258 = vld [vmem:[#allocation9] sm:$0xff]
    %v259 = vld [vmem:[#allocation9 + $0x8] sm:$0xff]
    %v260 = vld [vmem:[#allocation9 + $0x10] sm:$0xff]
    %v261 = vld [vmem:[#allocation9 + $0x18] sm:$0xff]
    %v262 = vld [vmem:[#allocation9 + $0x20] sm:$0xff]
    %v263 = vld [vmem:[#allocation9 + $0x28] sm:$0xff]
    %v264 = vld [vmem:[#allocation9 + $0x30] sm:$0xff]
    %v265 = vld [vmem:[#allocation9 + $0x38] sm:$0xff]
    %v266 = vld [vmem:[#allocation9 + $0x40] sm:$0xff]
    %v267 = vld [vmem:[#allocation9 + $0x48] sm:$0xff]
    %v268 = vld [vmem:[#allocation9 + $0x50] sm:$0xff]
    %v269 = vld [vmem:[#allocation9 + $0x58] sm:$0xff]
    %v270 = vld [vmem:[#allocation9 + $0x60] sm:$0xff]
    %v271 = vld [vmem:[#allocation9 + $0x68] sm:$0xff]
    %v272 = vld [vmem:[#allocation9 + $0x70] sm:$0xff]
    %v273 = vld [vmem:[#allocation9 + $0x78] sm:$0xff]
    %v274 = vld [vmem:[%s6] sm:$0x3]
    %v276 = vlaneseq
    %v277 = vshrl.u32 %v276, 7
    %v278 = vsub.s32 0, %v277
    %v279 = vrot.slane %v274, %v278
    %v280 = vlaneseq
    %v281 = vshrl.u32 %v280, 7
    %v282 = vsub.s32 1, %v281
    %v283 = vrot.slane %v274, %v282
    %vm286 = vcmask 523264
    %v288 = vsel %vm286, %v257, 0
    %290 = vmatprep.subr.mxu0 0.0
    %291 = vmatpush1.msra.mxu0 0.0
    %292 = vmatprep.subr.mxu0 0.0
    %293 = vmatpush1.msra.mxu0 0.0
    %294 = vmatprep.subr.mxu0 0.0
    %295 = vmatpush1.msra.mxu0 0.0
    %296 = vmatprep.subr.mxu0 0.0
    %297 = vmatpush1.msra.mxu0 0.0
    %298 = vmatprep.subr.mxu0 0.0
    %299 = vmatpush1.msra.mxu0 0.0
    %300 = vmatprep.subr.mxu0 0.0
    %301 = vmatpush1.msra.mxu0 0.0
    %302 = vmatprep.subr.mxu0 0.0
    %303 = vmatpush1.msra.mxu0 0.0
    %304 = vmatprep.subr.mxu0 0.0
    %305 = vmatpush1.msra.mxu0 0.0
    %306 = vmatprep.subr.mxu0 %v273
    %307 = vmatpush1.msra.mxu0 %v272
    %308 = vmatprep.subr.mxu0 %v271
    %309 = vmatpush1.msra.mxu0 %v270
    %310 = vmatprep.subr.mxu0 %v269
    %311 = vmatpush1.msra.mxu0 %v268
    %312 = vmatprep.subr.mxu0 %v267
    %313 = vmatpush1.msra.mxu0 %v266
    %314 = vmatprep.subr.mxu0 %v265
    %315 = vmatpush1.msra.mxu0 %v264
    %316 = vmatprep.subr.mxu0 %v263
    %317 = vmatpush1.msra.mxu0 %v262
    %318 = vmatprep.subr.mxu0 %v261
    %319 = vmatpush1.msra.mxu0 %v260
    %320 = vmatprep.subr.mxu0 %v259
    %321 = vmatpush1.msra.mxu0 %v258
    %322 = vmatprep.subr.mxu0 0.0
    %323 = vmatpush2.msra.mxu0 0.0
    %324 = vmatprep.subr.mxu0 0.0
    %325 = vmatpush2.msra.mxu0 0.0
    %326 = vmatprep.subr.mxu0 0.0
    %327 = vmatpush2.msra.mxu0 0.0
    %328 = vmatprep.subr.mxu0 0.0
    %329 = vmatpush2.msra.mxu0 0.0
    %330 = vmatprep.subr.mxu0 0.0
    %331 = vmatpush2.msra.mxu0 0.0
    %332 = vmatprep.subr.mxu0 0.0
    %333 = vmatpush2.msra.mxu0 0.0
    %334 = vmatprep.subr.mxu0 0.0
    %335 = vmatpush2.msra.mxu0 0.0
    %336 = vmatprep.subr.mxu0 0.0
    %337 = vmatpush2.msra.mxu0 0.0
    %338 = vmatprep.subr.mxu0 0.0
    %339 = vmatpush2.msra.mxu0 0.0
    %340 = vmatprep.subr.mxu0 0.0
    %341 = vmatpush2.msra.mxu0 0.0
    %342 = vmatprep.subr.mxu0 0.0
    %343 = vmatpush2.msra.mxu0 0.0
    %344 = vmatprep.subr.mxu0 0.0
    %345 = vmatpush2.msra.mxu0 0.0
    %346 = vmatprep.subr.mxu0 0.0
    %347 = vmatpush2.msra.mxu0 0.0
    %348 = vmatprep.subr.mxu0 0.0
    %349 = vmatpush2.msra.mxu0 0.0
    %350 = vmatprep.subr.mxu0 0.0
    %351 = vmatpush2.msra.mxu0 0.0
    %352 = vmatprep.subr.mxu0 0.0
    %353 = vmatpush2.msra.mxu0 0.0
    %354 = vmatprep.mubr.f32.mxu0 0.0
    %355 = vmatmul.mubr.f32.gmra.mxu0 %v288
    %v356 = vpop.f32.mrf.mxu0
    %v357 = vadd.f32 %v279, %v356
    %v358 = vpop.f32.mrf.mxu0
    %v359 = vadd.f32 %v283, %v358
    %360 = vdwg.mxu0
    %v363 = vcombine.low %v357, %v359
    %v365 = vunpack.c.l.s4 1983009808
    %v366 = vunpack.c.0.s8 %v365
    %v367 = vlaneseq
    %v368 = vshrl.u32 %v367, 7
    %v369 = vsub.s32 %v366, %v368
    %v370 = vrot.slane %v363, %v369
    %372 = vst [vmem:[%s7] sm:$0xf] %v370
    // Predicated region
    $region50: #{dense_decoder_forward.1} parent=1 // pred_check
      _
    $region51: #{dense_decoder_forward.1} parent=1 // pred_check_branch
      %374 = sbr.rel (0) target = $region53
    $region52: #{dense_decoder_forward.1} parent=1 // pred_region
      _
    $region53: #{dense_decoder_forward.1} parent=1 // pred_fallthru
      _
    // Predicated region
    $region54: #{dense_decoder_forward.1} parent=1 // pred_check
      _
    $region55: #{dense_decoder_forward.1} parent=1 // pred_check_branch
      %376 = sbr.rel (0) target = $region57
    $region56: #{dense_decoder_forward.1} parent=1 // pred_region
      _
    $region57: #{dense_decoder_forward.1} parent=1 // pred_fallthru
      _
    %377 = vsyncpa [#allocation3], 1
    %378 = vsyncpa [#allocation5], 1
    %379 = vsyncpa [#allocation8], 1

</llo_original>
